<compile_context>
chip_gen: v6e
topology: v6e:2x2x1
jax: 0.10.0
libtpu: 0.0.40
codegen_flags: <defaults>
</compile_context>

<pallas_src>
import jax
import jax.numpy as jnp
from jax.experimental import pallas as pl
from jax.experimental.pallas import tpu as pltpu

BN_EPS = 1e-5


def fc_bn_relu_kernel(x_ref, w_ref, gamma_ref, beta_ref, o_ref):
    # ---- Linear (this feature tile): y = x @ W_tile^T, f32 accumulation (MXU)
    # w_ref is (tile_n, in_dim); contract both operands on their last dim so no
    # transposed copy of W is ever materialized.
    y = jax.lax.dot_general(
        x_ref[...], w_ref[...],
        dimension_numbers=(((1,), (1,)), ((), ())),
        preferred_element_type=jnp.float32,
    )  # (N, tile_n) f32

    # ---- BatchNorm1d, training mode (batch statistics, biased variance) ----
    # One pass over y: sum(y) and sum(y*y); var = E[y^2] - E[y]^2 (clamped).
    n = y.shape[0]
    inv_n = 1.0 / n
    s1 = jnp.sum(y, axis=0, keepdims=True)
    s2 = jnp.sum(y * y, axis=0, keepdims=True)
    mean = s1 * inv_n
    var = jnp.maximum(s2 * inv_n - mean * mean, 0.0)
    inv_std = jax.lax.rsqrt(var + BN_EPS)

    # ---- per-domain affine folded into the per-feature scale, then ReLU ----
    scale = gamma_ref[...] * inv_std            # (1, tile_n) -- cheap
    out = (y - mean) * scale + beta_ref[...]    # single full-tile FMA-ish path
    o_ref[...] = jnp.maximum(out, 0.0).astype(o_ref.dtype)


def _round_up(v, m):
    return (v + m - 1) // m * m


def fc_bn_relu_domain(x, weight, bias, gammas, betas, domain=0,
                      compute_dtype=jnp.bfloat16):
    """x: (N, in_dim); weight: (out_dim, in_dim); bias: (out_dim,);
    gammas/betas: (num_domains, out_dim). Returns (N, out_dim) f32."""
    n, in_dim = x.shape
    out_dim = weight.shape[0]

    # The Linear bias is cancelled exactly by the BN batch-mean subtraction, so
    # it is not sent to the kernel at all (dead work otherwise).
    del bias
    # TODO(synk): BatchNorm1d running_mean/running_var training-state updates
    # (the only place the bias would matter) are not materialized; only the
    # forward output is produced.

    # Lane-dense padding (multiples of 128 on the feature axes). The batch axis
    # is NOT padded: BN statistics couple all rows.
    in_p = _round_up(in_dim, 128)
    out_p = _round_up(out_dim, 128)

    # In a real model the weights would be stored pre-cast to bf16; the cast
    # here is a one-off wrapper op for the demo.
    xp = x.astype(compute_dtype)
    wp = weight.astype(compute_dtype)
    if in_p != in_dim:
        xp = jnp.pad(xp, ((0, 0), (0, in_p - in_dim)))
        wp = jnp.pad(wp, ((0, 0), (0, in_p - in_dim)))
    if out_p != out_dim:
        wp = jnp.pad(wp, ((0, out_p - out_dim), (0, 0)))

    gamma2 = gammas[domain].reshape(1, out_dim).astype(jnp.float32)
    beta2 = betas[domain].reshape(1, out_dim).astype(jnp.float32)
    if out_p != out_dim:
        gamma2 = jnp.pad(gamma2, ((0, 0), (0, out_p - out_dim)),
                         constant_values=1.0)
        beta2 = jnp.pad(beta2, ((0, 0), (0, out_p - out_dim)))

    # Feature-tile size: lane-dense multiple of 128 that divides out_p.
    # (Small enough to stay well inside v7x's 64 MiB VMEM when double-buffered,
    # big enough to amortize per-step grid overhead on v5e/v6e.)
    tile_n = next(t for t in (512, 384, 256, 128) if out_p % t == 0)
    grid = (out_p // tile_n,)

    out_padded = pl.pallas_call(
        fc_bn_relu_kernel,
        out_shape=jax.ShapeDtypeStruct((n, out_p), jnp.float32),
        grid=grid,
        in_specs=[
            pl.BlockSpec((n, in_p), lambda j: (0, 0)),        # x: resident
            pl.BlockSpec((tile_n, in_p), lambda j: (j, 0)),   # W feature tile
            pl.BlockSpec((1, tile_n), lambda j: (0, j)),      # gamma tile
            pl.BlockSpec((1, tile_n), lambda j: (0, j)),      # beta tile
        ],
        out_specs=pl.BlockSpec((n, tile_n), lambda j: (0, j)),
        compiler_params=pltpu.CompilerParams(
            # Feature tiles are independent (BN stats are per-feature) ->
            # shard across the 2 TensorCores on v7x; no-op on v5e/v6e.
            dimension_semantics=("parallel",),
        ),
    )(xp, wp, gamma2, beta2)

    return out_padded[:, :out_dim]


def reference(x, weight, bias, gammas, betas, domain=0,
              compute_dtype=jnp.bfloat16):
    # Mirrors the kernel's bf16-operand / f32-accumulate matmul so the
    # comparison isolates kernel bugs rather than cast rounding.
    y = jnp.dot(x.astype(compute_dtype), weight.astype(compute_dtype).T,
                preferred_element_type=jnp.float32) + bias
    mean = jnp.mean(y, axis=0, keepdims=True)
    var = jnp.mean((y - mean) ** 2, axis=0, keepdims=True)
    y_hat = (y - mean) / jnp.sqrt(var + BN_EPS)
    return jnp.maximum(gammas[domain] * y_hat + betas[domain], 0.0)


if __name__ == "__main__":
    key = jax.random.PRNGKey(0)
    k_x, k_w, k_b, k_g = jax.random.split(key, 4)

    batch, in_dim, out_dim, num_domains_bn = 8, 32, 64, 2

    x = jax.random.normal(k_x, (batch, in_dim), dtype=jnp.float32)
    # mimic nn.Linear init: uniform(-1/sqrt(in_dim), 1/sqrt(in_dim))
    bound = 1.0 / (in_dim ** 0.5)
    weight = jax.random.uniform(k_w, (out_dim, in_dim), jnp.float32, -bound, bound)
    bias = jax.random.uniform(k_b, (out_dim,), jnp.float32, -bound, bound)
    # per-domain BN affine params (default gamma=1, beta=0; perturbed so the
    # domain selection is exercised non-trivially).
    gammas = 1.0 + 0.1 * jax.random.normal(k_g, (num_domains_bn, out_dim), jnp.float32)
    betas = 0.05 * jnp.arange(num_domains_bn, dtype=jnp.float32)[:, None] * jnp.ones(
        (num_domains_bn, out_dim), jnp.float32
    )

    domain = 1  # set_bn_domain(1)
    out = fc_bn_relu_domain(x, weight, bias, gammas, betas, domain=domain)
    out = jax.block_until_ready(out)

    ref = reference(x, weight, bias, gammas, betas, domain=domain)
    assert out.shape == (batch, out_dim)
    assert jnp.allclose(out, ref, atol=2e-3, rtol=2e-3), "mismatch vs reference"

    print("KERNEL_OK")
</pallas_src>

<mosaic_0001>
module attributes {stable_mosaic.version = 11 : i64} {
  func.func @fc_bn_relu_kernel(%arg0: i32, %arg1: memref<8x128xbf16, #tpu.memory_space<vmem>>, %arg2: memref<128x128xbf16, #tpu.memory_space<vmem>>, %arg3: memref<1x128xf32, #tpu.memory_space<vmem>>, %arg4: memref<1x128xf32, #tpu.memory_space<vmem>>, %arg5: memref<8x128xf32, #tpu.memory_space<vmem>>) attributes {dimension_semantics = [#tpu.dimension_semantics<parallel>], iteration_bounds = array<i64: 1>, scalar_prefetch = 0 : i64, scratch_operands = 0 : i64, tpu.core_type = #tpu.core_type<tc>, window_params = [{pipeline_mode = #tpu.pipeline_mode<synchronous>, transform_indices = @transform_0, window_bounds = array<i64: 8, 128>}, {transform_indices = @transform_1, window_bounds = array<i64: 128, 128>}, {transform_indices = @transform_2, window_bounds = array<i64: 1, 128>}, {transform_indices = @transform_3, window_bounds = array<i64: 1, 128>}, {transform_indices = @transform_4, window_bounds = array<i64: 8, 128>}]} {
    %c0 = arith.constant 0 : index
    %c0_0 = arith.constant 0 : index
    %0 = vector.load %arg1[%c0, %c0_0] : memref<8x128xbf16, #tpu.memory_space<vmem>>, vector<8x128xbf16>
    %c0_1 = arith.constant 0 : index
    %c0_2 = arith.constant 0 : index
    %1 = vector.load %arg2[%c0_1, %c0_2] : memref<128x128xbf16, #tpu.memory_space<vmem>>, vector<128x128xbf16>
    %cst = arith.constant dense<0.000000e+00> : vector<8x128xf32>
    %2 = tpu.matmul %0, %1, %cst {dimension_numbers = #tpu.dot_dimension_numbers<[1], [1], [0], [0], [0, 0, 1, 0], [], []>} : vector<8x128xbf16>, vector<128x128xbf16>, vector<8x128xf32> -> vector<8x128xf32>
    %cst_3 = arith.constant dense<0.000000e+00> : vector<128xf32>
    %3 = vector.multi_reduction <add>, %2, %cst_3 [0] : vector<8x128xf32> to vector<128xf32>
    %4 = vector.shape_cast %3 : vector<128xf32> to vector<1x128xf32>
    %5 = arith.mulf %2, %2 : vector<8x128xf32>
    %cst_4 = arith.constant dense<0.000000e+00> : vector<128xf32>
    %6 = vector.multi_reduction <add>, %5, %cst_4 [0] : vector<8x128xf32> to vector<128xf32>
    %7 = vector.shape_cast %6 : vector<128xf32> to vector<1x128xf32>
    %cst_5 = arith.constant 1.250000e-01 : f32
    %8 = vector.broadcast %cst_5 : f32 to vector<1x128xf32>
    %9 = arith.mulf %4, %8 : vector<1x128xf32>
    %cst_6 = arith.constant 1.250000e-01 : f32
    %10 = vector.broadcast %cst_6 : f32 to vector<1x128xf32>
    %11 = arith.mulf %7, %10 : vector<1x128xf32>
    %12 = arith.mulf %9, %9 : vector<1x128xf32>
    %13 = arith.subf %11, %12 : vector<1x128xf32>
    %cst_7 = arith.constant 0.000000e+00 : f32
    %14 = vector.broadcast %cst_7 : f32 to vector<1x128xf32>
    %15 = arith.maximumf %13, %14 : vector<1x128xf32>
    %cst_8 = arith.constant 9.99999974E-6 : f32
    %16 = vector.broadcast %cst_8 : f32 to vector<1x128xf32>
    %17 = arith.addf %15, %16 : vector<1x128xf32>
    %18 = math.rsqrt %17 : vector<1x128xf32>
    %c0_9 = arith.constant 0 : index
    %c0_10 = arith.constant 0 : index
    %19 = vector.load %arg3[%c0_9, %c0_10] : memref<1x128xf32, #tpu.memory_space<vmem>>, vector<1x128xf32>
    %20 = arith.mulf %19, %18 : vector<1x128xf32>
    %21 = vector.broadcast %9 : vector<1x128xf32> to vector<8x128xf32>
    %22 = arith.subf %2, %21 : vector<8x128xf32>
    %23 = vector.broadcast %20 : vector<1x128xf32> to vector<8x128xf32>
    %24 = arith.mulf %22, %23 : vector<8x128xf32>
    %c0_11 = arith.constant 0 : index
    %c0_12 = arith.constant 0 : index
    %25 = vector.load %arg4[%c0_11, %c0_12] : memref<1x128xf32, #tpu.memory_space<vmem>>, vector<1x128xf32>
    %26 = vector.broadcast %25 : vector<1x128xf32> to vector<8x128xf32>
    %27 = arith.addf %24, %26 : vector<8x128xf32>
    %cst_13 = arith.constant 0.000000e+00 : f32
    %28 = vector.broadcast %cst_13 : f32 to vector<8x128xf32>
    %29 = arith.maximumf %27, %28 : vector<8x128xf32>
    %c0_14 = arith.constant 0 : index
    %c0_15 = arith.constant 0 : index
    %30 = vector.load %arg5[%c0_14, %c0_15] : memref<8x128xf32, #tpu.memory_space<vmem>>, vector<8x128xf32>
    tpu.vector_store %arg5[%c0_14, %c0_15], %29 {strides = array<i32>} : memref<8x128xf32, #tpu.memory_space<vmem>>, vector<8x128xf32>,
    return
  }
  func.func @transform_0(%arg0: i32) -> (i32, i32) {
    %c0_i32 = arith.constant 0 : i32
    %c0_i32_0 = arith.constant 0 : i32
    %c0_i32_1 = arith.constant 0 : i32
    return %c0_i32, %c0_i32_0 : i32, i32
  }
  func.func @transform_1(%arg0: i32) -> (i32, i32) {
    %c0_i32 = arith.constant 0 : i32
    %c0_i32_0 = arith.constant 0 : i32
    return %arg0, %c0_i32 : i32, i32
  }
  func.func @transform_2(%arg0: i32) -> (i32, i32) {
    %c0_i32 = arith.constant 0 : i32
    %c0_i32_0 = arith.constant 0 : i32
    return %c0_i32, %arg0 : i32, i32
  }
  func.func @transform_3(%arg0: i32) -> (i32, i32) {
    %c0_i32 = arith.constant 0 : i32
    %c0_i32_0 = arith.constant 0 : i32
    return %c0_i32, %arg0 : i32, i32
  }
  func.func @transform_4(%arg0: i32) -> (i32, i32) {
    %c0_i32 = arith.constant 0 : i32
    %c0_i32_0 = arith.constant 0 : i32
    return %c0_i32, %arg0 : i32, i32
  }
}

</mosaic_0001>

<llo_original>
// kernel: tpu_custom_call.1
$region0: #{tpu_custom_call.1}
  #allocation0 [shape = 'u32[]', space=smem, size = 0x4, offset = 0x4, fixed_abs, tag = 'smem constant byte address 0x4 - core index']
  #allocation1 [shape = 'u32[144,128]{1,0:T(1,128)}', space=vmem, size = 0x12000, scoped, tag = 'internal scratch']
  %s0 = inlined_call_operand.hbm [shape: bf16[8,128], index: 0, kind: input, shape index: {}]
  %s1 = inlined_call_operand.hbm [shape: bf16[128,128], index: 1, kind: input, shape index: {}]
  %s2 = inlined_call_operand.vmem [shape: f32[1,128], index: 2, kind: input, shape index: {}]
  %s3 = inlined_call_operand.vmem [shape: f32[1,128], index: 3, kind: input, shape index: {}]
  %s4 = inlined_call_operand.hbm [shape: f32[8,128], index: 4, kind: output, shape index: {}]
  %s5 = sld [smem:[#allocation0]]
  $region34: #{tpu_custom_call.1} parent=0
    _
  %s7 = ssub.s32 1, %s5
  %s8 = scalar_select 0, %s7, %s5
  $region1: #{tpu_custom_call.1} parent=0
    #allocation2 [shape = 'u8[2048]{0}', space=vmem, size = 0x800, scoped, tag = 'input window, operand 0, single buffered']
    #allocation3 [shape = 's32[1]{0}', space=sflag, size = 0x4, scoped, tag = 'scoped memory for tpu_custom_call.1']
    #allocation4 [shape = 's32[1]{0}', space=sflag, size = 0x4, scoped, tag = 'scoped memory for tpu_custom_call.1']
    #allocation5 [shape = 'u8[32768]{0}', space=vmem, size = 0x8000, scoped, tag = 'input window, operand 1, single buffered']
    #allocation6 [shape = 's32[1]{0}', space=sflag, size = 0x4, scoped, tag = 'scoped memory for tpu_custom_call.1']
    #allocation7 [shape = 'u8[4096]{0}', space=vmem, size = 0x1000, scoped, tag = 'output window, operand 0, single buffered']
    %9 = vsyncpa [#allocation3], 0
    %10 = vsyncpa [#allocation6], 0
    %11 = vsyncpa [#allocation4], 0
    // Predicated region
    $region2: #{tpu_custom_call.1} parent=1 // pred_check
      _
    $region3: #{tpu_custom_call.1} parent=1 // pred_check_branch
      %13 = sbr.rel (0) target = $region5
    $region4: #{tpu_custom_call.1} parent=1 // pred_region
      %s15 = ssub.s32 64, 64
      %16 = vsyncadd [#allocation3], %s15
      %s18 = sshll.u32 [#allocation2], 4
      %s19 = int_to_ptr.vmem [resolvable:$true] %s18
      %21 = dma.hbm_to_vmem [thread:$0]  %s0, 64, %s19, [#allocation3]
    $region5: #{tpu_custom_call.1} parent=1 // pred_fallthru
      _
    // Predicated region
    $region6: #{tpu_custom_call.1} parent=1 // pred_check
      _
    $region7: #{tpu_custom_call.1} parent=1 // pred_check_branch
      %23 = sbr.rel (0) target = $region9
    $region8: #{tpu_custom_call.1} parent=1 // pred_region
      %s25 = ssub.s32 1024, 1024
      %26 = vsyncadd [#allocation6], %s25
      %s27 = sshll.u32 [#allocation5], 4
      %s28 = int_to_ptr.vmem [resolvable:$true] %s27
      %33 = dma.hbm_to_vmem [thread:$0]  %s1, 1024, %s28, [#allocation6], 64, 64, 4
    $region9: #{tpu_custom_call.1} parent=1 // pred_fallthru
      _
    // Predicated region
    $region10: #{tpu_custom_call.1} parent=1 // pred_check
      _
    $region11: #{tpu_custom_call.1} parent=1 // pred_check_branch
      %35 = sbr.rel (0) target = $region13
    $region12: #{tpu_custom_call.1} parent=1 // pred_region
      _
    $region13: #{tpu_custom_call.1} parent=1 // pred_fallthru
      _
    // Predicated region
    $region14: #{tpu_custom_call.1} parent=1 // pred_check
      _
    $region15: #{tpu_custom_call.1} parent=1 // pred_check_branch
      %37 = sbr.rel (0) target = $region17
    $region16: #{tpu_custom_call.1} parent=1 // pred_region
      _
    $region17: #{tpu_custom_call.1} parent=1 // pred_fallthru
      _
    // Predicated region
    $region18: #{tpu_custom_call.1} parent=1 // pred_check
      _
    $region19: #{tpu_custom_call.1} parent=1 // pred_check_branch
      %39 = sbr.rel (0) target = $region21
    $region20: #{tpu_custom_call.1} parent=1 // pred_region
      %40 = dma.done [#allocation3], 64
    $region21: #{tpu_custom_call.1} parent=1 // pred_fallthru
      _
    // Predicated region
    $region22: #{tpu_custom_call.1} parent=1 // pred_check
      _
    $region23: #{tpu_custom_call.1} parent=1 // pred_check_branch
      %42 = sbr.rel (0) target = $region25
    $region24: #{tpu_custom_call.1} parent=1 // pred_region
      %43 = dma.done [#allocation6], 1024
    $region25: #{tpu_custom_call.1} parent=1 // pred_fallthru
      _
    %v45 = vld [vmem:[#allocation2] sm:$0xf]
    %v46 = vld [vmem:[#allocation5] sm:$0xf]
    %v47 = vld [vmem:[#allocation5 + $0x4] sm:$0xf]
    %v48 = vld [vmem:[#allocation5 + $0x8] sm:$0xf]
    %v49 = vld [vmem:[#allocation5 + $0xc] sm:$0xf]
    %v50 = vld [vmem:[#allocation5 + $0x10] sm:$0xf]
    %v51 = vld [vmem:[#allocation5 + $0x14] sm:$0xf]
    %v52 = vld [vmem:[#allocation5 + $0x18] sm:$0xf]
    %v53 = vld [vmem:[#allocation5 + $0x1c] sm:$0xf]
    %v54 = vld [vmem:[#allocation5 + $0x20] sm:$0xf]
    %v55 = vld [vmem:[#allocation5 + $0x24] sm:$0xf]
    %v56 = vld [vmem:[#allocation5 + $0x28] sm:$0xf]
    %v57 = vld [vmem:[#allocation5 + $0x2c] sm:$0xf]
    %v58 = vld [vmem:[#allocation5 + $0x30] sm:$0xf]
    %v59 = vld [vmem:[#allocation5 + $0x34] sm:$0xf]
    %v60 = vld [vmem:[#allocation5 + $0x38] sm:$0xf]
    %v61 = vld [vmem:[#allocation5 + $0x3c] sm:$0xf]
    %v78 = vunpack.c.l.b16 %v46
    %v79 = vunpack.c.l.b16 %v47
    %v80 = vunpack.c.l.b16 %v48
    %v81 = vunpack.c.l.b16 %v49
    %v82 = vunpack.c.l.b16 %v50
    %v83 = vunpack.c.l.b16 %v51
    %v84 = vunpack.c.l.b16 %v52
    %v85 = vunpack.c.l.b16 %v53
    %v86 = vunpack.c.l.b16 %v54
    %v87 = vunpack.c.l.b16 %v55
    %v88 = vunpack.c.l.b16 %v56
    %v89 = vunpack.c.l.b16 %v57
    %v90 = vunpack.c.l.b16 %v58
    %v91 = vunpack.c.l.b16 %v59
    %v92 = vunpack.c.l.b16 %v60
    %v93 = vunpack.c.l.b16 %v61
    %v94 = vpack.c.b16 %v79, %v78
    %v95 = vpack.c.b16 %v81, %v80
    %v96 = vpack.c.b16 %v83, %v82
    %v97 = vpack.c.b16 %v85, %v84
    %v98 = vpack.c.b16 %v87, %v86
    %v99 = vpack.c.b16 %v89, %v88
    %v100 = vpack.c.b16 %v91, %v90
    %v101 = vpack.c.b16 %v93, %v92
    %110 = vmatprep.subr.bf16.mxu0 0
    %111 = vmatpush1.bf16.xpose.msra.mxu0 %v101
    %112 = vmatprep.subr.bf16.mxu0 0
    %113 = vmatpush1.bf16.xpose.msra.mxu0 %v100
    %114 = vmatprep.subr.bf16.mxu0 0
    %115 = vmatpush1.bf16.xpose.msra.mxu0 %v99
    %116 = vmatprep.subr.bf16.mxu0 0
    %117 = vmatpush1.bf16.xpose.msra.mxu0 %v98
    %118 = vmatprep.subr.bf16.mxu0 0
    %119 = vmatpush1.bf16.xpose.msra.mxu0 %v97
    %120 = vmatprep.subr.bf16.mxu0 0
    %121 = vmatpush1.bf16.xpose.msra.mxu0 %v96
    %122 = vmatprep.subr.bf16.mxu0 0
    %123 = vmatpush1.bf16.xpose.msra.mxu0 %v95
    %124 = vmatprep.subr.bf16.mxu0 0
    %125 = vmatpush1.bf16.xpose.msra.mxu0 %v94
    %126 = vmatprep.subr.bf16.mxu0 0
    %127 = vmatpush2.bf16.xpose.msra.mxu0 0
    %128 = vmatprep.subr.bf16.mxu0 0
    %129 = vmatpush2.bf16.xpose.msra.mxu0 0
    %130 = vmatprep.subr.bf16.mxu0 0
    %131 = vmatpush2.bf16.xpose.msra.mxu0 0
    %132 = vmatprep.subr.bf16.mxu0 0
    %133 = vmatpush2.bf16.xpose.msra.mxu0 0
    %134 = vmatprep.subr.bf16.mxu0 0
    %135 = vmatpush2.bf16.xpose.msra.mxu0 0
    %136 = vmatprep.subr.bf16.mxu0 0
    %137 = vmatpush2.bf16.xpose.msra.mxu0 0
    %138 = vmatprep.subr.bf16.mxu0 0
    %139 = vmatpush2.bf16.xpose.msra.mxu0 0
    %140 = vmatprep.subr.bf16.mxu0 0
    %141 = vmatpush2.bf16.xpose.msra.mxu0 0
    %142 = vmatprep.mubr.bf16.mxu0 0
    %143 = vmatmul.mubr.bf16.gmra.mxu0 %v45
    %v144 = vpop.f32.mrf.mxu0
    %v145 = vadd.f32 0.0, %v144
    %v146 = vpop.f32.mrf.mxu0
    %v147 = vpop.f32.mrf.mxu0
    %v148 = vpop.f32.mrf.mxu0
    %149 = vdwg.mxu0
    %v150 = vrot.slane %v145, 4
    %v151 = vadd.f32 %v145, %v150
    %v152 = vrot.slane %v151, 2
    %v153 = vadd.f32 %v151, %v152
    %v154 = vrot.slane %v153, 1
    %v155 = vadd.f32 %v153, %v154
    %v156 = vmul.f32 %v145, %v145
    %v157 = vrot.slane %v156, 4
    %v158 = vadd.f32 %v156, %v157
    %v159 = vrot.slane %v158, 2
    %v160 = vadd.f32 %v158, %v159
    %v161 = vrot.slane %v160, 1
    %v162 = vadd.f32 %v160, %v161
    %v163 = vmul.f32 %v155, 0.125
    %v164 = vmul.f32 %v162, 0.125
    %v165 = vmul.f32 %v163, %v163
    %v166 = vsub.f32 %v164, %v165
    %v167 = vmax.f32 %v166, 0.0
    %v168 = vadd.f32 %v167, 1e-05
    %v169 = vrsqrt.pop %v168
    %v170 = vld [vmem:[%s2] sm:$0x1]
    %v171 = vmul.f32 %v170, %v169
    %v172 = vsub.f32 %v145, %v163
    %v174 = vlaneseq
    %v175 = vshrl.u32 %v174, 7
    %v176 = vsub.s32 0, %v175
    %v177 = vrot.slane %v171, %v176
    %v179 = vmul.f32 %v172, %v177
    %v180 = vld [vmem:[%s3] sm:$0x1]
    %v182 = vlaneseq
    %v183 = vshrl.u32 %v182, 7
    %v184 = vsub.s32 0, %v183
    %v185 = vrot.slane %v180, %v184
    %v187 = vadd.f32 %v179, %v185
    %v188 = vmax.f32 %v187, 0.0
    %189 = vst [vmem:[#allocation7] sm:$0xff] %v188
    // Predicated region
    $region26: #{tpu_custom_call.1} parent=1 // pred_check
      _
    $region27: #{tpu_custom_call.1} parent=1 // pred_check_branch
      %191 = sbr.rel (0) target = $region29
    $region28: #{tpu_custom_call.1} parent=1 // pred_region
      %s193 = ssub.s32 128, 128
      %194 = vsyncadd [#allocation4], %s193
      %s196 = sshll.u32 [#allocation7], 4
      %s197 = int_to_ptr.vmem [resolvable:$true] %s196
      %199 = dma.vmem_to_hbm [thread:$0]  %s197, 128, %s4, [#allocation4]
    $region29: #{tpu_custom_call.1} parent=1 // pred_fallthru
      _
    // Predicated region
    $region30: #{tpu_custom_call.1} parent=1 // pred_check
      _
    $region31: #{tpu_custom_call.1} parent=1 // pred_check_branch
      %201 = sbr.rel (0) target = $region33
    $region32: #{tpu_custom_call.1} parent=1 // pred_region
      %202 = dma.done [#allocation4], 128
    $region33: #{tpu_custom_call.1} parent=1 // pred_fallthru
      _
    %203 = vsyncpa [#allocation3], 1
    %204 = vsyncpa [#allocation6], 1
    %205 = vsyncpa [#allocation4], 1

</llo_original>
